<compile_context>
chip_gen: v5e
topology: v5e:2x2
jax: 0.10.0
libtpu: 0.0.40
codegen_flags: <defaults>
</compile_context>

<pallas_src>
import functools
import math

import jax
import jax.numpy as jnp
from jax.experimental import pallas as pl
from jax.experimental.pallas import tpu as pltpu

# Problem sizes (small, consistent with the module's forward: X is (batch, sz_embed))
B = 16            # batch
E = 32            # sz_embed
C = 8             # nb_classes
K = 16            # centers_per_class
LA = 20.0
GAMMA = 0.1
MARGIN = 0.01
EPS = 1e-12       # F.normalize eps
EPS2 = EPS * EPS


def _make_kernel(b, e, c, k, la, gamma_inv, margin):
    def kernel(x_ref, w_ref, g_ref, t_ref, out_ref):
        # x_ref: (B, E) f32 ; w_ref: (E, C*K) f32 ; g_ref: (C*K, C) f32
        # t_ref: (B, 1) i32 ; out_ref: (1, 1) f32
        x = x_ref[...]
        w = w_ref[...]
        g = g_ref[...]

        # L2-normalize embeddings: x / max(||x||, eps) == x * rsqrt(max(ss, eps^2))
        xn = x * jax.lax.rsqrt(
            jnp.maximum(jnp.sum(x * x, axis=1, keepdims=True), EPS2))

        # Per-center (column) inverse norms of the weight slab.  Column
        # normalization commutes with the matmul, so it becomes a single
        # (1, C*K) broadcast scale on the matmul result.
        inv_wnorm = jax.lax.rsqrt(
            jnp.maximum(jnp.sum(w * w, axis=0, keepdims=True), EPS2))   # (1, C*K)

        # One lane-dense MXU matmul: (B, E) @ (E, C*K) -> (B, C*K) = (16, 128)
        s = jnp.dot(xn, w, preferred_element_type=jnp.float32) * inv_wnorm

        # Softmax over each class's K contiguous columns, fused with the
        # weighted sum: simcls_c = sum_k softmax_k(s/gamma) * s_k.
        # |s| <= 1 (cosine sims), so a constant shift of 1.0 keeps exp args
        # in [-2/gamma, 0]; the shift cancels exactly in num/den.
        p = jnp.exp((s - 1.0) * gamma_inv)                              # (B, C*K)
        den = jnp.dot(p, g, preferred_element_type=jnp.float32)         # (B, C)
        num = jnp.dot(p * s, g, preferred_element_type=jnp.float32)     # (B, C)
        sim_to_classes = num / den                                      # (B, C)

        # margin only on the true class, then scale by la
        labels = t_ref[...]                                             # (B, 1) int32
        class_ids = jax.lax.broadcasted_iota(jnp.int32, (b, c), 1)
        onehot = (class_ids == labels).astype(jnp.float32)              # (B, C)
        logits = la * (sim_to_classes - margin * onehot)

        # cross entropy per sample, then mean over batch
        lmax = jnp.max(logits, axis=1, keepdims=True)
        lse = jnp.log(jnp.sum(jnp.exp(logits - lmax), axis=1, keepdims=True)) + lmax
        tgt = jnp.sum(onehot * logits, axis=1, keepdims=True)
        per_sample = lse - tgt                                          # (B, 1)
        out_ref[...] = jnp.sum(per_sample, axis=0, keepdims=True) * (1.0 / b)

    return kernel


@functools.partial(jax.jit, static_argnames=("nb_classes", "centers_per_class"))
def soft_triple_loss_angle(X, T, fc, *, nb_classes=C, centers_per_class=K):
    """X: (B, E) float32, T: (B,) int labels, fc: (E, C*K) float32 parameter."""
    b, e = X.shape
    c, k = nb_classes, centers_per_class

    # Native fc layout (E, C*K): column j -> (class j // K, center j % K), so
    # the K centers of each class occupy contiguous lanes and the group
    # indicator is block-diagonal.  No repack / transpose needed.
    w = fc.astype(jnp.float32)
    t2 = T.astype(jnp.int32).reshape(b, 1)

    # Static block-diagonal group indicator G[j, cls] = (j // K == cls).
    g = (jnp.arange(c * k, dtype=jnp.int32)[:, None] // k
         == jnp.arange(c, dtype=jnp.int32)[None, :]).astype(jnp.float32)

    kernel = _make_kernel(b, e, c, k, LA, 1.0 / GAMMA, MARGIN)
    out = pl.pallas_call(
        kernel,
        out_shape=jax.ShapeDtypeStruct((1, 1), jnp.float32),
        in_specs=[
            pl.BlockSpec(memory_space=pltpu.MemorySpace.VMEM),
            pl.BlockSpec(memory_space=pltpu.MemorySpace.VMEM),
            pl.BlockSpec(memory_space=pltpu.MemorySpace.VMEM),
            pl.BlockSpec(memory_space=pltpu.MemorySpace.VMEM),
        ],
        out_specs=pl.BlockSpec(memory_space=pltpu.MemorySpace.VMEM),
    )(X.astype(jnp.float32), w, g, t2)
    return out[0, 0]


def _reference(X, T, fc):
    """Plain-JAX reference mirroring pytorch-metric-learning SoftTripleLoss."""
    Xn = X / jnp.maximum(jnp.linalg.norm(X, axis=1, keepdims=True), EPS)
    Wn = fc / jnp.maximum(jnp.linalg.norm(fc, axis=0, keepdims=True), EPS)
    s = (Xn @ Wn).reshape(-1, C, K)
    prob = jax.nn.softmax(s * (1.0 / GAMMA), axis=2)
    sim_to_classes = jnp.sum(prob * s, axis=2)
    onehot = jax.nn.one_hot(T, C, dtype=jnp.float32)
    logits = LA * (sim_to_classes - MARGIN * onehot)
    logz = jax.scipy.special.logsumexp(logits, axis=1)
    losses = logz - jnp.sum(onehot * logits, axis=1)
    return jnp.mean(losses)


if __name__ == "__main__":
    key = jax.random.PRNGKey(0)
    kx, kw, kt = jax.random.split(key, 3)

    # Embeddings and integer labels
    X = jax.random.normal(kx, (B, E), dtype=jnp.float32)
    T = jax.random.randint(kt, (B,), 0, C, dtype=jnp.int32)

    # fc parameter (E, C*K), deterministic kaiming_uniform_(a=sqrt(5))-style init:
    # fan_in = C*K, bound = 1/sqrt(fan_in)
    bound = 1.0 / math.sqrt(C * K)
    fc = jax.random.uniform(kw, (E, C * K), dtype=jnp.float32,
                            minval=-bound, maxval=bound)

    loss = soft_triple_loss_angle(X, T, fc)
    loss = jax.block_until_ready(loss)

    ref = _reference(X, T, fc)
    assert jnp.allclose(loss, ref, rtol=1e-5, atol=1e-5), (loss, ref)

    print("KERNEL_OK")
</pallas_src>

<mosaic_0001>
module attributes {stable_mosaic.version = 11 : i64} {
  func.func @kernel(%arg0: memref<16x32xf32, #tpu.memory_space<vmem>>, %arg1: memref<32x128xf32, #tpu.memory_space<vmem>>, %arg2: memref<128x8xf32, #tpu.memory_space<vmem>>, %arg3: memref<16x1xi32, #tpu.memory_space<vmem>>, %arg4: memref<1x1xf32, #tpu.memory_space<vmem>>) attributes {dimension_semantics = [], scalar_prefetch = 0 : i64, scratch_operands = 0 : i64, tpu.core_type = #tpu.core_type<tc>} {
    %c0 = arith.constant 0 : index
    %c0_0 = arith.constant 0 : index
    %0 = vector.load %arg0[%c0, %c0_0] : memref<16x32xf32, #tpu.memory_space<vmem>>, vector<16x32xf32>
    %c0_1 = arith.constant 0 : index
    %c0_2 = arith.constant 0 : index
    %1 = vector.load %arg1[%c0_1, %c0_2] : memref<32x128xf32, #tpu.memory_space<vmem>>, vector<32x128xf32>
    %c0_3 = arith.constant 0 : index
    %c0_4 = arith.constant 0 : index
    %2 = vector.load %arg2[%c0_3, %c0_4] : memref<128x8xf32, #tpu.memory_space<vmem>>, vector<128x8xf32>
    %3 = arith.mulf %0, %0 : vector<16x32xf32>
    %cst = arith.constant dense<0.000000e+00> : vector<16xf32>
    %4 = vector.multi_reduction <add>, %3, %cst [1] : vector<16x32xf32> to vector<16xf32>
    %5 = vector.shape_cast %4 : vector<16xf32> to vector<16x1xf32>
    %cst_5 = arith.constant 1.000000e-24 : f32
    %6 = vector.broadcast %cst_5 : f32 to vector<16x1xf32>
    %7 = arith.maximumf %5, %6 : vector<16x1xf32>
    %8 = math.rsqrt %7 : vector<16x1xf32>
    %9 = vector.broadcast %8 : vector<16x1xf32> to vector<16x32xf32>
    %10 = arith.mulf %0, %9 : vector<16x32xf32>
    %11 = arith.mulf %1, %1 : vector<32x128xf32>
    %cst_6 = arith.constant dense<0.000000e+00> : vector<128xf32>
    %12 = vector.multi_reduction <add>, %11, %cst_6 [0] : vector<32x128xf32> to vector<128xf32>
    %13 = vector.shape_cast %12 : vector<128xf32> to vector<1x128xf32>
    %cst_7 = arith.constant 1.000000e-24 : f32
    %14 = vector.broadcast %cst_7 : f32 to vector<1x128xf32>
    %15 = arith.maximumf %13, %14 : vector<1x128xf32>
    %16 = math.rsqrt %15 : vector<1x128xf32>
    %cst_8 = arith.constant dense<0.000000e+00> : vector<16x128xf32>
    %17 = tpu.matmul %10, %1, %cst_8 {dimension_numbers = #tpu.dot_dimension_numbers<[1], [0], [0], [1], [0, 0, 1, 1], [], []>} : vector<16x32xf32>, vector<32x128xf32>, vector<16x128xf32> -> vector<16x128xf32>
    %18 = vector.broadcast %16 : vector<1x128xf32> to vector<16x128xf32>
    %19 = arith.mulf %17, %18 : vector<16x128xf32>
    %cst_9 = arith.constant 1.000000e+00 : f32
    %20 = vector.broadcast %cst_9 : f32 to vector<16x128xf32>
    %21 = arith.subf %19, %20 : vector<16x128xf32>
    %cst_10 = arith.constant 1.000000e+01 : f32
    %22 = vector.broadcast %cst_10 : f32 to vector<16x128xf32>
    %23 = arith.mulf %21, %22 : vector<16x128xf32>
    %24 = math.exp %23 : vector<16x128xf32>
    %cst_11 = arith.constant dense<0.000000e+00> : vector<16x8xf32>
    %25 = tpu.matmul %24, %2, %cst_11 {dimension_numbers = #tpu.dot_dimension_numbers<[1], [0], [0], [1], [0, 0, 1, 1], [], []>} : vector<16x128xf32>, vector<128x8xf32>, vector<16x8xf32> -> vector<16x8xf32>
    %26 = arith.mulf %24, %19 : vector<16x128xf32>
    %cst_12 = arith.constant dense<0.000000e+00> : vector<16x8xf32>
    %27 = tpu.matmul %26, %2, %cst_12 {dimension_numbers = #tpu.dot_dimension_numbers<[1], [0], [0], [1], [0, 0, 1, 1], [], []>} : vector<16x128xf32>, vector<128x8xf32>, vector<16x8xf32> -> vector<16x8xf32>
    %28 = arith.divf %27, %25 : vector<16x8xf32>
    %c0_13 = arith.constant 0 : index
    %c0_14 = arith.constant 0 : index
    %29 = vector.load %arg3[%c0_13, %c0_14] : memref<16x1xi32, #tpu.memory_space<vmem>>, vector<16x1xi32>
    %30 = tpu.iota {dimensions = array<i32: 1>} : vector<16x8xi32>
    %31 = vector.broadcast %29 : vector<16x1xi32> to vector<16x8xi32>
    %32 = arith.cmpi eq, %30, %31 : vector<16x8xi32>
    %33 = arith.extui %32 : vector<16x8xi1> to vector<16x8xi32>
    %34 = arith.sitofp %33 : vector<16x8xi32> to vector<16x8xf32>
    %cst_15 = arith.constant 0.00999999977 : f32
    %35 = vector.broadcast %cst_15 : f32 to vector<16x8xf32>
    %36 = arith.mulf %35, %34 : vector<16x8xf32>
    %37 = arith.subf %28, %36 : vector<16x8xf32>
    %cst_16 = arith.constant 2.000000e+01 : f32
    %38 = vector.broadcast %cst_16 : f32 to vector<16x8xf32>
    %39 = arith.mulf %38, %37 : vector<16x8xf32>
    %cst_17 = arith.constant dense<0xFF800000> : vector<16xf32>
    %40 = vector.multi_reduction <maximumf>, %39, %cst_17 [1] : vector<16x8xf32> to vector<16xf32>
    %41 = vector.shape_cast %40 : vector<16xf32> to vector<16x1xf32>
    %42 = vector.broadcast %41 : vector<16x1xf32> to vector<16x8xf32>
    %43 = arith.subf %39, %42 : vector<16x8xf32>
    %44 = math.exp %43 : vector<16x8xf32>
    %cst_18 = arith.constant dense<0.000000e+00> : vector<16xf32>
    %45 = vector.multi_reduction <add>, %44, %cst_18 [1] : vector<16x8xf32> to vector<16xf32>
    %46 = vector.shape_cast %45 : vector<16xf32> to vector<16x1xf32>
    %47 = math.log %46 : vector<16x1xf32>
    %48 = arith.addf %47, %41 : vector<16x1xf32>
    %49 = arith.mulf %34, %39 : vector<16x8xf32>
    %cst_19 = arith.constant dense<0.000000e+00> : vector<16xf32>
    %50 = vector.multi_reduction <add>, %49, %cst_19 [1] : vector<16x8xf32> to vector<16xf32>
    %51 = vector.shape_cast %50 : vector<16xf32> to vector<16x1xf32>
    %52 = arith.subf %48, %51 : vector<16x1xf32>
    %cst_20 = arith.constant dense<0.000000e+00> : vector<1xf32>
    %53 = vector.multi_reduction <add>, %52, %cst_20 [0] : vector<16x1xf32> to vector<1xf32>
    %54 = vector.shape_cast %53 : vector<1xf32> to vector<1x1xf32>
    %cst_21 = arith.constant 6.250000e-02 : f32
    %55 = vector.broadcast %cst_21 : f32 to vector<1x1xf32>
    %56 = arith.mulf %54, %55 : vector<1x1xf32>
    %c0_22 = arith.constant 0 : index
    %c0_23 = arith.constant 0 : index
    %57 = vector.load %arg4[%c0_22, %c0_23] : memref<1x1xf32, #tpu.memory_space<vmem>>, vector<1x1xf32>
    tpu.vector_store %arg4[%c0_22, %c0_23], %56 {strides = array<i32>} : memref<1x1xf32, #tpu.memory_space<vmem>>, vector<1x1xf32>,
    return
  }
}

</mosaic_0001>

<llo_original>
// kernel: soft_triple_loss_angle.1
$region0: #{soft_triple_loss_angle.1}
  #allocation0 [shape = 'u32[]', space=smem, size = 0x4, offset = 0x4, fixed_abs, tag = 'smem constant byte address 0x4 - core index']
  #allocation1 [shape = 'u32[72,128]{1,0:T(1,128)}', space=vmem, size = 0x9000, scoped, tag = 'internal scratch']
  %s0 = inlined_call_operand.vmem [shape: f32[16,32], index: 0, kind: input, shape index: {}]
  %s1 = inlined_call_operand.vmem [shape: f32[32,128], index: 1, kind: input, shape index: {}]
  %s2 = inlined_call_operand.vmem [shape: f32[128,8], index: 2, kind: input, shape index: {}]
  %s3 = inlined_call_operand.vmem [shape: s32[16,1], index: 3, kind: input, shape index: {}]
  %s4 = inlined_call_operand.hbm [shape: f32[1,1], index: 4, kind: output, shape index: {}]
  %s5 = sld [smem:[#allocation0]]
  $region26: #{soft_triple_loss_angle.1} parent=0
    _
  %s7 = ssub.s32 1, %s5
  %s8 = scalar_select 0, %s7, %s5
  $region1: #{soft_triple_loss_angle.1} parent=0
    #allocation2 [shape = 'u8[512]{0}', space=vmem, size = 0x400, scoped, tag = 'output window, operand 0, single buffered']
    #allocation3 [shape = 's32[1]{0}', space=sflag, size = 0x4, scoped, tag = 'scoped memory for soft_triple_loss_angle.1']
    %9 = vsyncpa [#allocation3], 0
    // Predicated region
    $region2: #{soft_triple_loss_angle.1} parent=1 // pred_check
      _
    $region3: #{soft_triple_loss_angle.1} parent=1 // pred_check_branch
      %11 = sbr.rel (0) target = $region5
    $region4: #{soft_triple_loss_angle.1} parent=1 // pred_region
      _
    $region5: #{soft_triple_loss_angle.1} parent=1 // pred_fallthru
      _
    // Predicated region
    $region6: #{soft_triple_loss_angle.1} parent=1 // pred_check
      _
    $region7: #{soft_triple_loss_angle.1} parent=1 // pred_check_branch
      %13 = sbr.rel (0) target = $region9
    $region8: #{soft_triple_loss_angle.1} parent=1 // pred_region
      _
    $region9: #{soft_triple_loss_angle.1} parent=1 // pred_fallthru
      _
    // Predicated region
    $region10: #{soft_triple_loss_angle.1} parent=1 // pred_check
      _
    $region11: #{soft_triple_loss_angle.1} parent=1 // pred_check_branch
      %15 = sbr.rel (0) target = $region13
    $region12: #{soft_triple_loss_angle.1} parent=1 // pred_region
      _
    $region13: #{soft_triple_loss_angle.1} parent=1 // pred_fallthru
      _
    // Predicated region
    $region14: #{soft_triple_loss_angle.1} parent=1 // pred_check
      _
    $region15: #{soft_triple_loss_angle.1} parent=1 // pred_check_branch
      %17 = sbr.rel (0) target = $region17
    $region16: #{soft_triple_loss_angle.1} parent=1 // pred_region
      _
    $region17: #{soft_triple_loss_angle.1} parent=1 // pred_fallthru
      _
    %v18 = vld [vmem:[%s0] sm:$0xff]
    %v19 = vld [vmem:[%s0 + $0x8] sm:$0xff]
    %v20 = vld [vmem:[%s1] sm:$0xff]
    %v21 = vld [vmem:[%s1 + $0x8] sm:$0xff]
    %v22 = vld [vmem:[%s1 + $0x10] sm:$0xff]
    %v23 = vld [vmem:[%s1 + $0x18] sm:$0xff]
    %v24 = vld [vmem:[%s2] sm:$0xff]
    %v25 = vld [vmem:[%s2 + $0x8] sm:$0xff]
    %v26 = vld [vmem:[%s2 + $0x10] sm:$0xff]
    %v27 = vld [vmem:[%s2 + $0x18] sm:$0xff]
    %v28 = vld [vmem:[%s2 + $0x20] sm:$0xff]
    %v29 = vld [vmem:[%s2 + $0x28] sm:$0xff]
    %v30 = vld [vmem:[%s2 + $0x30] sm:$0xff]
    %v31 = vld [vmem:[%s2 + $0x38] sm:$0xff]
    %v32 = vld [vmem:[%s2 + $0x40] sm:$0xff]
    %v33 = vld [vmem:[%s2 + $0x48] sm:$0xff]
    %v34 = vld [vmem:[%s2 + $0x50] sm:$0xff]
    %v35 = vld [vmem:[%s2 + $0x58] sm:$0xff]
    %v36 = vld [vmem:[%s2 + $0x60] sm:$0xff]
    %v37 = vld [vmem:[%s2 + $0x68] sm:$0xff]
    %v38 = vld [vmem:[%s2 + $0x70] sm:$0xff]
    %v39 = vld [vmem:[%s2 + $0x78] sm:$0xff]
    %v40 = vmul.f32 %v18, %v18
    %v41 = vmul.f32 %v19, %v19
    %vm42 = vcmask 261120
    %v43 = vsel %vm42, %v40, 0.0
    %44 = vadd.xlane.f32.xlu0 %v43
    %v45 = vpop.xlane.xlu0 %44
    %v46 = vsel %vm42, %v41, 0.0
    %47 = vadd.xlane.f32.xlu0 %v46
    %v48 = vpop.xlane.xlu0 %47
    %v49 = vmax.f32 %v45, 1e-24
    %v50 = vmax.f32 %v48, 1e-24
    %v51 = vrsqrt.pop %v49
    %v52 = vmul.f32 %v51, %v49
    %v53 = vmul.f32 %v52, %v51
    %v54 = vmul.f32 0.5, %v53
    %v55 = vsub.f32 1.5, %v54
    %v56 = vmul.f32 %v51, %v55
    %vm57 = vweird.f32 %v49
    %vm58 = vweird.f32 %v51
    %vm59 = vmor %vm57, %vm58
    %v60 = vsel %vm59, %v51, %v56
    %v61 = vrsqrt.pop %v50
    %v62 = vmul.f32 %v61, %v50
    %v63 = vmul.f32 %v62, %v61
    %v64 = vmul.f32 0.5, %v63
    %v65 = vsub.f32 1.5, %v64
    %v66 = vmul.f32 %v61, %v65
    %vm67 = vweird.f32 %v50
    %vm68 = vweird.f32 %v61
    %vm69 = vmor %vm67, %vm68
    %v70 = vsel %vm69, %v61, %v66
    %v71 = vmul.f32 %v18, %v60
    %v72 = vmul.f32 %v19, %v70
    %v73 = vmul.f32 %v20, %v20
    %v74 = vmul.f32 %v21, %v21
    %v75 = vmul.f32 %v22, %v22
    %v76 = vmul.f32 %v23, %v23
    %v77 = vadd.f32 %v73, %v74
    %v78 = vadd.f32 %v77, %v75
    %v79 = vadd.f32 %v78, %v76
    %v80 = vrot.slane %v79, 4
    %v81 = vadd.f32 %v79, %v80
    %v82 = vrot.slane %v81, 2
    %v83 = vadd.f32 %v81, %v82
    %v84 = vrot.slane %v83, 1
    %v85 = vadd.f32 %v83, %v84
    %v86 = vmax.f32 %v85, 1e-24
    %v87 = vrsqrt.pop %v86
    %v88 = vmul.f32 %v87, %v86
    %v89 = vmul.f32 %v88, %v87
    %v90 = vmul.f32 0.5, %v89
    %v91 = vsub.f32 1.5, %v90
    %v92 = vmul.f32 %v87, %v91
    %vm93 = vweird.f32 %v86
    %vm94 = vweird.f32 %v87
    %vm95 = vmor %vm93, %vm94
    %v96 = vsel %vm95, %v87, %v92
    %v98 = vsel %vm42, %v71, 0
    %v101 = vsel %vm42, %v72, 0
    %103 = vmatpush.msra.mxu0 0.0
    %104 = vmatpush.msra.mxu0 0.0
    %105 = vmatpush.msra.mxu0 0.0
    %106 = vmatpush.msra.mxu0 0.0
    %107 = vmatpush.msra.mxu0 0.0
    %108 = vmatpush.msra.mxu0 0.0
    %109 = vmatpush.msra.mxu0 0.0
    %110 = vmatpush.msra.mxu0 0.0
    %111 = vmatpush.msra.mxu0 0.0
    %112 = vmatpush.msra.mxu0 0.0
    %113 = vmatpush.msra.mxu0 0.0
    %114 = vmatpush.msra.mxu0 0.0
    %115 = vmatpush.msra.mxu0 %v23
    %116 = vmatpush.msra.mxu0 %v22
    %117 = vmatpush.msra.mxu0 %v21
    %118 = vmatpush.msra.mxu0 %v20
    %119 = vmatmul.f32.gmra.mxu0 %v98
    %v120 = vpop.f32.mrf.mxu0
    %v121 = vadd.f32 0.0, %v120
    %122 = vmatmul.f32.gmra.mxu0 %v101
    %v123 = vpop.f32.mrf.mxu0
    %v124 = vadd.f32 0.0, %v123
    %125 = vdwg.mxu0
    %v126 = vmul.f32 %v121, %v96
    %v127 = vmul.f32 %v124, %v96
    %v128 = vsub.f32 %v126, 1.0
    %v129 = vsub.f32 %v127, 1.0
    %v130 = vmul.f32 %v128, 10.0
    %v131 = vmul.f32 %v129, 10.0
    %v132 = vmul.f32 %v130, 1.442695
    %v133 = vpow.pop %v132
    %v134 = vmul.f32 %v131, 1.442695
    %v135 = vpow.pop %v134
    %136 = vmatpush.msra.mxu0 %v39
    %137 = vmatpush.msra.mxu0 %v38
    %138 = vmatpush.msra.mxu0 %v37
    %139 = vmatpush.msra.mxu0 %v36
    %140 = vmatpush.msra.mxu0 %v35
    %141 = vmatpush.msra.mxu0 %v34
    %142 = vmatpush.msra.mxu0 %v33
    %143 = vmatpush.msra.mxu0 %v32
    %144 = vmatpush.msra.mxu0 %v31
    %145 = vmatpush.msra.mxu0 %v30
    %146 = vmatpush.msra.mxu0 %v29
    %147 = vmatpush.msra.mxu0 %v28
    %148 = vmatpush.msra.mxu0 %v27
    %149 = vmatpush.msra.mxu0 %v26
    %150 = vmatpush.msra.mxu0 %v25
    %151 = vmatpush.msra.mxu0 %v24
    %152 = vmatmul.f32.gmra.mxu0 %v133
    %v153 = vpop.f32.mrf.mxu0
    %v154 = vadd.f32 0.0, %v153
    %155 = vmatmul.f32.gmra.mxu0 %v135
    %v156 = vpop.f32.mrf.mxu0
    %v157 = vadd.f32 0.0, %v156
    %158 = vdwg.mxu0
    %v159 = vmul.f32 %v133, %v126
    %v160 = vmul.f32 %v135, %v127
    %161 = vmatpush.msra.mxu0 %v39
    %162 = vmatpush.msra.mxu0 %v38
    %163 = vmatpush.msra.mxu0 %v37
    %164 = vmatpush.msra.mxu0 %v36
    %165 = vmatpush.msra.mxu0 %v35
    %166 = vmatpush.msra.mxu0 %v34
    %167 = vmatpush.msra.mxu0 %v33
    %168 = vmatpush.msra.mxu0 %v32
    %169 = vmatpush.msra.mxu0 %v31
    %170 = vmatpush.msra.mxu0 %v30
    %171 = vmatpush.msra.mxu0 %v29
    %172 = vmatpush.msra.mxu0 %v28
    %173 = vmatpush.msra.mxu0 %v27
    %174 = vmatpush.msra.mxu0 %v26
    %175 = vmatpush.msra.mxu0 %v25
    %176 = vmatpush.msra.mxu0 %v24
    %177 = vmatmul.f32.gmra.mxu0 %v159
    %v178 = vpop.f32.mrf.mxu0
    %v179 = vadd.f32 0.0, %v178
    %180 = vmatmul.f32.gmra.mxu0 %v160
    %v181 = vpop.f32.mrf.mxu0
    %v182 = vadd.f32 0.0, %v181
    %183 = vdwg.mxu0
    %v184 = vrcp.pop %v154
    %v185 = vmul.f32 %v154, %v184
    %v186 = vsub.f32 1.0, %v185
    %v187 = vmul.f32 %v184, %v186
    %v188 = vadd.f32 %v184, %v187
    %vm189 = vweird.f32 %v154
    %vm190 = vweird.f32 %v184
    %vm191 = vmor %vm189, %vm190
    %v192 = vsel %vm191, %v184, %v188
    %v193 = vand.u32 2147483647, %v154
    %vm194 = vcmp.eq.f32.partialorder %v193, 8.507059e+37
    %v195 = vand.u32 %v154, 2147483648
    %v196 = vor.u32 1.1754944e-38, %v195
    %v197 = vsel %vm194, %v196, %v192
    %v198 = vmul.f32 %v179, %v197
    %v199 = vrcp.pop %v157
    %v200 = vmul.f32 %v157, %v199
    %v201 = vsub.f32 1.0, %v200
    %v202 = vmul.f32 %v199, %v201
    %v203 = vadd.f32 %v199, %v202
    %vm204 = vweird.f32 %v157
    %vm205 = vweird.f32 %v199
    %vm206 = vmor %vm204, %vm205
    %v207 = vsel %vm206, %v199, %v203
    %v208 = vand.u32 2147483647, %v157
    %vm209 = vcmp.eq.f32.partialorder %v208, 8.507059e+37
    %v210 = vand.u32 %v157, 2147483648
    %v211 = vor.u32 1.1754944e-38, %v210
    %v212 = vsel %vm209, %v211, %v207
    %v213 = vmul.f32 %v182, %v212
    %v214 = vld [vmem:[%s3] sm:$0xff]
    %v215 = vld [vmem:[%s3 + $0x8] sm:$0xff]
    %v216 = vlaneseq
    %v217 = vand.u32 %v216, 127
    %218 = vset.pattern.permute.xlu0 0
    %219 = vperm.xlu0 %218, %v214
    %v220 = vpop.permute.xlu0 %219
    %221 = vset.pattern.permute.xlu0 0
    %222 = vperm.xlu0 %221, %v215
    %v223 = vpop.permute.xlu0 %222
    %vm224 = vcmp.eq.s32.totalorder %v217, %v220
    %vm225 = vcmp.eq.s32.totalorder %v217, %v223
    %v226 = vsel %vm224, 1, 0
    %v227 = vsel %vm225, 1, 0
    %v228 = vcvt.s32.f32 %v226
    %v229 = vcvt.s32.f32 %v227
    %v230 = vmul.f32 %v228, 0.01
    %v231 = vmul.f32 %v229, 0.01
    %v232 = vsub.f32 %v198, %v230
    %v233 = vsub.f32 %v213, %v231
    %v234 = vmul.f32 %v232, 20.0
    %v235 = vmul.f32 %v233, 20.0
    %vm236 = vcmask 64512
    %v237 = vsel %vm236, %v234, -inf
    %238 = vmax.xlane.f32.xlu0 %v237
    %v239 = vpop.xlane.xlu0 %238
    %v240 = vsel %vm236, %v235, -inf
    %241 = vmax.xlane.f32.xlu0 %v240
    %v242 = vpop.xlane.xlu0 %241
    %v243 = vsub.f32 %v234, %v239
    %v244 = vsub.f32 %v235, %v242
    %v245 = vmul.f32 %v243, 1.442695
    %v246 = vpow.pop %v245
    %v247 = vmul.f32 %v244, 1.442695
    %v248 = vpow.pop %v247
    %v249 = vsel %vm236, %v246, 0.0
    %250 = vadd.xlane.f32.xlu0 %v249
    %v251 = vpop.xlane.xlu0 %250
    %v252 = vsel %vm236, %v248, 0.0
    %253 = vadd.xlane.f32.xlu0 %v252
    %v254 = vpop.xlane.xlu0 %253
    %v255 = vlog2.pop %v251
    %v256 = vmul.f32 %v255, 0.6931472
    %v257 = vlog2.pop %v254
    %v258 = vmul.f32 %v257, 0.6931472
    %v259 = vadd.f32 %v256, %v239
    %v260 = vadd.f32 %v258, %v242
    %v261 = vmul.f32 %v228, %v234
    %v262 = vmul.f32 %v229, %v235
    %v263 = vsel %vm236, %v261, 0.0
    %264 = vadd.xlane.f32.xlu0 %v263
    %v265 = vpop.xlane.xlu0 %264
    %v266 = vsel %vm236, %v262, 0.0
    %267 = vadd.xlane.f32.xlu0 %v266
    %v268 = vpop.xlane.xlu0 %267
    %v269 = vsub.f32 %v259, %v265
    %v270 = vsub.f32 %v260, %v268
    %v271 = vadd.f32 %v269, %v270
    %v272 = vrot.slane %v271, 4
    %v273 = vadd.f32 %v271, %v272
    %v274 = vrot.slane %v273, 2
    %v275 = vadd.f32 %v273, %v274
    %v276 = vrot.slane %v275, 1
    %v277 = vadd.f32 %v275, %v276
    %v278 = vmul.f32 %v277, 0.0625
    %vm279 = vcmask 0
    %280 = vst.msk [vmem:[#allocation2] sm:$0x1] %vm279, %v278
    // Predicated region
    $region18: #{soft_triple_loss_angle.1} parent=1 // pred_check
      _
    $region19: #{soft_triple_loss_angle.1} parent=1 // pred_check_branch
      %282 = sbr.rel (0) target = $region21
    $region20: #{soft_triple_loss_angle.1} parent=1 // pred_region
      %284 = vsyncadd [#allocation3], 0
      %s286 = sshll.u32 [#allocation2], 4
      %s287 = int_to_ptr.vmem [resolvable:$true] %s286
      %s288 = sshll.u32 %s4, 4
      %s289 = int_to_ptr.hbm [resolvable:$true] %s288
      %291 = dma.vmem_to_hbm [thread:$0]  %s287, 16, %s289, [#allocation3]
    $region21: #{soft_triple_loss_angle.1} parent=1 // pred_fallthru
      _
    // Predicated region
    $region22: #{soft_triple_loss_angle.1} parent=1 // pred_check
      _
    $region23: #{soft_triple_loss_angle.1} parent=1 // pred_check_branch
      %293 = sbr.rel (0) target = $region25
    $region24: #{soft_triple_loss_angle.1} parent=1 // pred_region
      %295 = dma.done [#allocation3], 16
    $region25: #{soft_triple_loss_angle.1} parent=1 // pred_fallthru
      _
    %296 = vsyncpa [#allocation3], 1

</llo_original>
